<compile_context>
chip_gen: v7x
topology: tpu7x:2x2x1
jax: 0.10.0
libtpu: 0.0.40
codegen_flags: <defaults>
</compile_context>

<pallas_src>
import jax
import jax.numpy as jnp
from jax.experimental import pallas as pl
from jax.experimental.pallas import tpu as pltpu


# ----------------------------- tuning knobs ---------------------------------
_TILE_ELEMS = 512 * 1024                  # ~2 MiB f32 per input block (85%+ of HBM roofline)
_VMEM_LIMIT = 40 * 1024 * 1024            # safe on v5e/v6e (128 MiB) and v7x (64 MiB/TC)
_FUSED_MAX_F32_BYTES = 2 * 1024 * 1024    # single-pass fused path below this size
_LANE_CHOICES = (4096, 2048, 1024, 512, 256, 128)
_FALLBACK_LANE = 1024                     # only used when total % 128 != 0 (pad path)


# ------------------------- fused single-pass kernel -------------------------
def _fused_kernel(a_ref, b_ref, att_ref, out_ref):
    a = a_ref[...].astype(jnp.float32)
    b = b_ref[...].astype(jnp.float32)
    att = att_ref[...].astype(jnp.float32)
    d = jnp.abs(att - (a - b))
    mn = jnp.min(d)
    mx = jnp.max(d)
    inv = 1.0 / (mx - mn)                 # inf/nan when max == min (matches torch)
    out_ref[...] = ((d - mn) * inv).astype(out_ref.dtype)


# ----------------------- two-pass kernels (large path) ----------------------
def _make_diff_partial_kernel(tile_m, lane_n, total, needs_mask):
    """Pass 1: diff tile + per-tile partial min/max (fully parallel grid)."""

    def kernel(a_ref, b_ref, att_ref, diff_ref, pmin_ref, pmax_ref):
        a = a_ref[...].astype(jnp.float32)
        b = b_ref[...].astype(jnp.float32)
        att = att_ref[...].astype(jnp.float32)
        d = jnp.abs(att - (a - b))
        diff_ref[...] = d.astype(diff_ref.dtype)

        if needs_mask:
            # Ragged last tile (or padded tail): exclude out-of-range / padded
            # elements (their VMEM contents are garbage/zeros) from the
            # reduction.  total < 2**31 so flat indices fit in int32.
            i = pl.program_id(0)
            row = jax.lax.broadcasted_iota(jnp.int32, (tile_m, lane_n), 0)
            col = jax.lax.broadcasted_iota(jnp.int32, (tile_m, lane_n), 1)
            flat = (i * tile_m + row) * lane_n + col
            valid = flat < total
            t_min = jnp.min(jnp.where(valid, d, jnp.inf))
            t_max = jnp.max(jnp.where(valid, d, -jnp.inf))
        else:
            t_min = jnp.min(d)
            t_max = jnp.max(d)

        # One lane-aligned (8,128) block per tile (tiny vs the 2 MiB diff
        # tile); the few partials are reduced to scalars in plain JAX.
        pmin_ref[...] = jnp.broadcast_to(t_min, (8, 128))
        pmax_ref[...] = jnp.broadcast_to(t_max, (8, 128))

    return kernel


def _normalize_kernel(scal_ref, diff_ref, out_ref):
    """Pass 2: out = (diff - mn) * inv with scalars from SMEM (in place)."""
    mn = scal_ref[0]
    inv = scal_ref[1]
    out_ref[...] = ((diff_ref[...].astype(jnp.float32) - mn) * inv).astype(out_ref.dtype)


# --------------------------------- helpers -----------------------------------
def _pick_fused_shape(total):
    """Lane-dense 2-D shape for the fused path."""
    for n in (2048, 1024, 512, 256, 128):
        if total % n == 0:
            return total // n, n
    return 1, total                       # tiny / odd size: full-extent last dim


def _pick_lane(total):
    """Largest lane width dividing `total` (avoids any padding copy)."""
    for n in _LANE_CHOICES:
        if total % n == 0:
            return n, False
    return _FALLBACK_LANE, True           # rare: pad flat tail up to lane width


# --------------------------------- wrapper ----------------------------------
@jax.jit
def image_subtraction_att(img1, img2, img_att):
    assert img1.shape == img2.shape == img_att.shape
    shape = img1.shape
    out_dtype = jnp.result_type(img1.dtype, img2.dtype, img_att.dtype)
    total = 1
    for s in shape:
        total *= s

    a = img1.reshape(-1)
    b = img2.reshape(-1)
    att = img_att.reshape(-1)

    # ---------- small tensors: fused single pass, whole slab in VMEM --------
    if total * 4 <= _FUSED_MAX_F32_BYTES:
        m, n = _pick_fused_shape(total)   # lane-dense (last dim multiple of 128)
        out = pl.pallas_call(
            _fused_kernel,
            out_shape=jax.ShapeDtypeStruct((m, n), out_dtype),
            compiler_params=pltpu.CompilerParams(vmem_limit_bytes=_VMEM_LIMIT),
        )(a.reshape(m, n), b.reshape(m, n), att.reshape(m, n))
        return out.reshape(shape)

    # ---------- large tensors: two passes with ~2 MiB lane-dense tiles ------
    lane_n, need_pad = _pick_lane(total)
    if need_pad:
        # Fallback only (total not a multiple of 128): pad the flat tail.
        m_rows = pl.cdiv(total, lane_n)
        pad = m_rows * lane_n - total
        a = jnp.pad(a, (0, pad))
        b = jnp.pad(b, (0, pad))
        att = jnp.pad(att, (0, pad))
    else:
        m_rows = total // lane_n          # free reshape, no copy

    a = a.reshape(m_rows, lane_n)
    b = b.reshape(m_rows, lane_n)
    att = att.reshape(m_rows, lane_n)

    target_rows = max(8, _TILE_ELEMS // lane_n)   # multiple of 8 for lane_n <= 4096
    tile_m = m_rows if m_rows <= target_rows else target_rows
    grid_m = pl.cdiv(m_rows, tile_m)
    # Mask the reduction whenever the grid coverage exceeds the real element
    # count (ragged last row-tile and/or padded tail).
    needs_mask = (grid_m * tile_m * lane_n) != total

    tiled = pl.BlockSpec((tile_m, lane_n), lambda i: (i, 0))
    partial_spec = pl.BlockSpec((8, 128), lambda i: (i, 0))

    diff, pmin, pmax = pl.pallas_call(
        _make_diff_partial_kernel(tile_m, lane_n, total, needs_mask),
        grid=(grid_m,),
        in_specs=[tiled, tiled, tiled],
        out_specs=(tiled, partial_spec, partial_spec),
        out_shape=(
            jax.ShapeDtypeStruct((m_rows, lane_n), out_dtype),
            jax.ShapeDtypeStruct((grid_m * 8, 128), jnp.float32),
            jax.ShapeDtypeStruct((grid_m * 8, 128), jnp.float32),
        ),
        compiler_params=pltpu.CompilerParams(
            dimension_semantics=("parallel",),
            vmem_limit_bytes=_VMEM_LIMIT),
    )(a, b, att)

    # Tiny host-side reduction of the per-tile partials + scalar hoisting.
    mn = jnp.min(pmin)
    mx = jnp.max(pmax)
    inv = 1.0 / (mx - mn)                 # inf/nan when max == min (matches torch)
    scalars = jnp.stack([mn, inv]).astype(jnp.float32)   # (2,) -> SMEM

    out = pl.pallas_call(
        _normalize_kernel,
        grid=(grid_m,),
        in_specs=[pl.BlockSpec(memory_space=pltpu.MemorySpace.SMEM), tiled],
        out_specs=tiled,
        out_shape=jax.ShapeDtypeStruct((m_rows, lane_n), out_dtype),
        input_output_aliases={1: 0},      # normalize the diff buffer in place
        compiler_params=pltpu.CompilerParams(
            dimension_semantics=("parallel",),
            vmem_limit_bytes=_VMEM_LIMIT),
    )(scalars, diff)

    out = out.reshape(-1)
    if need_pad:
        out = out[:total]
    return out.reshape(shape)


def _reference(img1, img2, img_att):
    diff = jnp.abs(img_att - (img1 - img2))
    return (diff - jnp.min(diff)) / (jnp.max(diff) - jnp.min(diff))


if __name__ == "__main__":
    key = jax.random.PRNGKey(0)
    k1, k2, k3, k4, k5, k6 = jax.random.split(key, 6)

    # 1) Small NCHW shape implied by the module -> fused single-pass kernel.
    shape_small = (2, 4, 16, 16)
    i1 = jax.random.normal(k1, shape_small, dtype=jnp.float32)
    i2 = jax.random.normal(k2, shape_small, dtype=jnp.float32)
    ia = jax.random.normal(k3, shape_small, dtype=jnp.float32)
    out_small = jax.block_until_ready(image_subtraction_att(i1, i2, ia))
    ref_small = _reference(i1, i2, ia)
    assert out_small.shape == shape_small
    assert jnp.allclose(out_small, ref_small, atol=1e-5, rtol=1e-5)

    # 2) Moderate shape -> exercises the tiled two-pass path (parallel grid,
    #    pad-free lane selection, ragged last tile with masked reduction,
    #    in-place normalize).
    shape_big = (4, 16, 132, 128)
    j1 = jax.random.normal(k4, shape_big, dtype=jnp.float32)
    j2 = jax.random.normal(k5, shape_big, dtype=jnp.float32)
    ja = jax.random.normal(k6, shape_big, dtype=jnp.float32)
    out_big = jax.block_until_ready(image_subtraction_att(j1, j2, ja))
    ref_big = _reference(j1, j2, ja)
    assert out_big.shape == shape_big
    assert jnp.allclose(out_big, ref_big, atol=1e-5, rtol=1e-5)

    print("KERNEL_OK")
</pallas_src>

<mosaic_0001>
module attributes {stable_mosaic.version = 11 : i64} {
  func.func @_fused_kernel(%arg0: memref<1x2048xf32, #tpu.memory_space<vmem>>, %arg1: memref<1x2048xf32, #tpu.memory_space<vmem>>, %arg2: memref<1x2048xf32, #tpu.memory_space<vmem>>, %arg3: memref<1x2048xf32, #tpu.memory_space<vmem>>) attributes {dimension_semantics = [], scalar_prefetch = 0 : i64, scratch_operands = 0 : i64, tpu.core_type = #tpu.core_type<tc>} {
    %c0 = arith.constant 0 : index
    %c0_0 = arith.constant 0 : index
    %0 = vector.load %arg0[%c0, %c0_0] : memref<1x2048xf32, #tpu.memory_space<vmem>>, vector<1x2048xf32>
    %c0_1 = arith.constant 0 : index
    %c0_2 = arith.constant 0 : index
    %1 = vector.load %arg1[%c0_1, %c0_2] : memref<1x2048xf32, #tpu.memory_space<vmem>>, vector<1x2048xf32>
    %c0_3 = arith.constant 0 : index
    %c0_4 = arith.constant 0 : index
    %2 = vector.load %arg2[%c0_3, %c0_4] : memref<1x2048xf32, #tpu.memory_space<vmem>>, vector<1x2048xf32>
    %3 = arith.subf %0, %1 : vector<1x2048xf32>
    %4 = arith.subf %2, %3 : vector<1x2048xf32>
    %5 = math.absf %4 : vector<1x2048xf32>
    %6 = vector.shape_cast %5 : vector<1x2048xf32> to vector<1x1x2048xf32>
    %cst = arith.constant dense<0x7F800000> : vector<1xf32>
    %7 = vector.multi_reduction <minimumf>, %6, %cst [1, 2] : vector<1x1x2048xf32> to vector<1xf32>
    %8 = vector.shape_cast %7 : vector<1xf32> to vector<1x1x1xf32>
    %9 = vector.extract %8[0, 0, 0] : f32 from vector<1x1x1xf32>
    %10 = vector.shape_cast %5 : vector<1x2048xf32> to vector<1x1x2048xf32>
    %cst_5 = arith.constant dense<0xFF800000> : vector<1xf32>
    %11 = vector.multi_reduction <maximumf>, %10, %cst_5 [1, 2] : vector<1x1x2048xf32> to vector<1xf32>
    %12 = vector.shape_cast %11 : vector<1xf32> to vector<1x1x1xf32>
    %13 = vector.extract %12[0, 0, 0] : f32 from vector<1x1x1xf32>
    %14 = arith.subf %13, %9 : f32
    %cst_6 = arith.constant 1.000000e+00 : f32
    %15 = arith.divf %cst_6, %14 : f32
    %16 = vector.broadcast %9 : f32 to vector<1x2048xf32>
    %17 = arith.subf %5, %16 : vector<1x2048xf32>
    %18 = vector.broadcast %15 : f32 to vector<1x2048xf32>
    %19 = arith.mulf %17, %18 : vector<1x2048xf32>
    %c0_7 = arith.constant 0 : index
    %c0_8 = arith.constant 0 : index
    %20 = vector.load %arg3[%c0_7, %c0_8] : memref<1x2048xf32, #tpu.memory_space<vmem>>, vector<1x2048xf32>
    tpu.vector_store %arg3[%c0_7, %c0_8], %19 {strides = array<i32>} : memref<1x2048xf32, #tpu.memory_space<vmem>>, vector<1x2048xf32>,
    return
  }
}

</mosaic_0001>

<llo_original>
// kernel: image_subtraction_att.1
$region0: #{image_subtraction_att.1}
  #allocation0 [shape = 'u32[]', space=smem, size = 0x4, offset = 0x4, fixed_abs, tag = 'smem constant byte address 0x4 - core index']
  #allocation1 [shape = 'u32[144,128]{1,0:T(1,128)}', space=vmem, size = 0x12000, scoped, tag = 'internal scratch']
  %s0 = inlined_call_operand.vmem [shape: f32[1,2048], index: 0, kind: input, shape index: {}]
  %s1 = inlined_call_operand.vmem [shape: f32[1,2048], index: 1, kind: input, shape index: {}]
  %s2 = inlined_call_operand.vmem [shape: f32[1,2048], index: 2, kind: input, shape index: {}]
  %s3 = inlined_call_operand.vmem [shape: f32[1,2048], index: 3, kind: output, shape index: {}]
  %s4 = sld [smem:[#allocation0]]
  $region22: #{image_subtraction_att.1} parent=0
    _
  %s6 = ssub.s32 1, %s4
  %s7 = scalar_select 0, %s6, %s4
  // Predicated region
  $region2: #{image_subtraction_att.1} parent=0 // pred_check
    _
  $region3: #{image_subtraction_att.1} parent=0 // pred_check_branch
    %9 = sbr.rel (0) target = $region5
  $region4: #{image_subtraction_att.1} parent=0 // pred_region
    _
  $region5: #{image_subtraction_att.1} parent=0 // pred_fallthru
    _
  // Predicated region
  $region6: #{image_subtraction_att.1} parent=0 // pred_check
    _
  $region7: #{image_subtraction_att.1} parent=0 // pred_check_branch
    %11 = sbr.rel (0) target = $region9
  $region8: #{image_subtraction_att.1} parent=0 // pred_region
    _
  $region9: #{image_subtraction_att.1} parent=0 // pred_fallthru
    _
  // Predicated region
  $region10: #{image_subtraction_att.1} parent=0 // pred_check
    _
  $region11: #{image_subtraction_att.1} parent=0 // pred_check_branch
    %13 = sbr.rel (0) target = $region13
  $region12: #{image_subtraction_att.1} parent=0 // pred_region
    _
  $region13: #{image_subtraction_att.1} parent=0 // pred_fallthru
    _
  %v14 = vld [vmem:[%s0] sm:$0xff]
  %v15 = vld [vmem:[%s0 + $0x8] sm:$0xff]
  %v16 = vld [vmem:[%s1] sm:$0xff]
  %v17 = vld [vmem:[%s1 + $0x8] sm:$0xff]
  %v18 = vld [vmem:[%s2] sm:$0xff]
  %v19 = vld [vmem:[%s2 + $0x8] sm:$0xff]
  %v20 = vsub.f32 %v14, %v16
  %v21 = vsub.f32 %v15, %v17
  %v22 = vsub.f32 %v18, %v20
  %v23 = vsub.f32 %v19, %v21
  %v24 = vand.u32 2147483647, %v22
  %v25 = vand.u32 2147483647, %v23
  %v28 = vlaneseq
  %v29 = vshrl.u32 %v28, 7
  %v30 = vsub.s32 0, %v29
  %v31 = vrot.slane %v24, %v30
  %v32 = vlaneseq
  %v33 = vshrl.u32 %v32, 7
  %v34 = vsub.s32 1, %v33
  %v35 = vrot.slane %v24, %v34
  %v36 = vlaneseq
  %v37 = vshrl.u32 %v36, 7
  %v38 = vsub.s32 2, %v37
  %v39 = vrot.slane %v24, %v38
  %v40 = vlaneseq
  %v41 = vshrl.u32 %v40, 7
  %v42 = vsub.s32 3, %v41
  %v43 = vrot.slane %v24, %v42
  %v44 = vlaneseq
  %v45 = vshrl.u32 %v44, 7
  %v46 = vsub.s32 4, %v45
  %v47 = vrot.slane %v24, %v46
  %v48 = vlaneseq
  %v49 = vshrl.u32 %v48, 7
  %v50 = vsub.s32 5, %v49
  %v51 = vrot.slane %v24, %v50
  %v52 = vlaneseq
  %v53 = vshrl.u32 %v52, 7
  %v54 = vsub.s32 6, %v53
  %v55 = vrot.slane %v24, %v54
  %v56 = vlaneseq
  %v57 = vshrl.u32 %v56, 7
  %v58 = vsub.s32 7, %v57
  %v59 = vrot.slane %v24, %v58
  %v60 = vlaneseq
  %v61 = vshrl.u32 %v60, 7
  %v62 = vsub.s32 0, %v61
  %v63 = vrot.slane %v25, %v62
  %v64 = vlaneseq
  %v65 = vshrl.u32 %v64, 7
  %v66 = vsub.s32 1, %v65
  %v67 = vrot.slane %v25, %v66
  %v68 = vlaneseq
  %v69 = vshrl.u32 %v68, 7
  %v70 = vsub.s32 2, %v69
  %v71 = vrot.slane %v25, %v70
  %v72 = vlaneseq
  %v73 = vshrl.u32 %v72, 7
  %v74 = vsub.s32 3, %v73
  %v75 = vrot.slane %v25, %v74
  %v76 = vlaneseq
  %v77 = vshrl.u32 %v76, 7
  %v78 = vsub.s32 4, %v77
  %v79 = vrot.slane %v25, %v78
  %v80 = vlaneseq
  %v81 = vshrl.u32 %v80, 7
  %v82 = vsub.s32 5, %v81
  %v83 = vrot.slane %v25, %v82
  %v84 = vlaneseq
  %v85 = vshrl.u32 %v84, 7
  %v86 = vsub.s32 6, %v85
  %v87 = vrot.slane %v25, %v86
  %v88 = vlaneseq
  %v89 = vshrl.u32 %v88, 7
  %v90 = vsub.s32 7, %v89
  %v91 = vrot.slane %v25, %v90
  %vm108 = vcmask 1040384
  %v109 = vsel %vm108, %v31, inf
  %v110 = vsel %vm108, %v35, inf
  %v111 = vsel %vm108, %v39, inf
  %v112 = vsel %vm108, %v43, inf
  %v113 = vsel %vm108, %v47, inf
  %v114 = vmin.f32 %v109, %v113
  %v115 = vsel %vm108, %v51, inf
  %v116 = vmin.f32 %v110, %v115
  %v117 = vsel %vm108, %v55, inf
  %v118 = vmin.f32 %v111, %v117
  %v119 = vsel %vm108, %v59, inf
  %v120 = vmin.f32 %v112, %v119
  %v121 = vsel %vm108, %v63, inf
  %v122 = vmin.f32 %v114, %v121
  %v123 = vsel %vm108, %v67, inf
  %v124 = vmin.f32 %v116, %v123
  %v125 = vsel %vm108, %v71, inf
  %v126 = vmin.f32 %v118, %v125
  %v127 = vsel %vm108, %v75, inf
  %v128 = vmin.f32 %v120, %v127
  %v129 = vsel %vm108, %v79, inf
  %v130 = vmin.f32 %v122, %v129
  %v131 = vsel %vm108, %v83, inf
  %v132 = vmin.f32 %v124, %v131
  %v133 = vsel %vm108, %v87, inf
  %v134 = vmin.f32 %v126, %v133
  %v135 = vsel %vm108, %v91, inf
  %v136 = vmin.f32 %v128, %v135
  %v137 = vmin.f32 %v130, %v132
  %v138 = vmin.f32 %v134, %v136
  %v139 = vmin.f32 %v137, %v138
  %140 = vmin.xlane.f32.xlu0 %v139
  %v141 = vpop.xlane.xlu0 %140
  %v142 = vrot.slane %v141, 4
  %v143 = vmin.f32 %v141, %v142
  %v144 = vrot.slane %v143, 2
  %v145 = vmin.f32 %v143, %v144
  %v146 = vrot.slane %v145, 1
  %v147 = vmin.f32 %v145, %v146
  %s148 = vtos %v147
  %v149 = vsel %vm108, %v31, -inf
  %v150 = vsel %vm108, %v35, -inf
  %v151 = vsel %vm108, %v39, -inf
  %v152 = vsel %vm108, %v43, -inf
  %v153 = vsel %vm108, %v47, -inf
  %v154 = vmax.f32 %v149, %v153
  %v155 = vsel %vm108, %v51, -inf
  %v156 = vmax.f32 %v150, %v155
  %v157 = vsel %vm108, %v55, -inf
  %v158 = vmax.f32 %v151, %v157
  %v159 = vsel %vm108, %v59, -inf
  %v160 = vmax.f32 %v152, %v159
  %v161 = vsel %vm108, %v63, -inf
  %v162 = vmax.f32 %v154, %v161
  %v163 = vsel %vm108, %v67, -inf
  %v164 = vmax.f32 %v156, %v163
  %v165 = vsel %vm108, %v71, -inf
  %v166 = vmax.f32 %v158, %v165
  %v167 = vsel %vm108, %v75, -inf
  %v168 = vmax.f32 %v160, %v167
  %v169 = vsel %vm108, %v79, -inf
  %v170 = vmax.f32 %v162, %v169
  %v171 = vsel %vm108, %v83, -inf
  %v172 = vmax.f32 %v164, %v171
  %v173 = vsel %vm108, %v87, -inf
  %v174 = vmax.f32 %v166, %v173
  %v175 = vsel %vm108, %v91, -inf
  %v176 = vmax.f32 %v168, %v175
  %v177 = vmax.f32 %v170, %v172
  %v178 = vmax.f32 %v174, %v176
  %v179 = vmax.f32 %v177, %v178
  %180 = vmax.xlane.f32.xlu0 %v179
  %v181 = vpop.xlane.xlu0 %180
  %v182 = vrot.slane %v181, 4
  %v183 = vmax.f32 %v181, %v182
  %v184 = vrot.slane %v183, 2
  %v185 = vmax.f32 %v183, %v184
  %v186 = vrot.slane %v185, 1
  %v187 = vmax.f32 %v185, %v186
  %s188 = vtos %v187
  %s189 = ssub.f32 %s188, %s148
  %v190 = vstv %s189
  %v191 = vrcp.pop %v190
  %s192 = vtos %v191
  %v193 = vstv %s148
  %v194 = vsub.f32 %v24, %v193
  %v195 = vsub.f32 %v25, %v193
  %v196 = vstv %s192
  %v197 = vmul.f32 %v194, %v196
  %v198 = vmul.f32 %v195, %v196
  %199 = vst [vmem:[%s3] sm:$0xff] %v197
  %200 = vst [vmem:[%s3 + $0x8] sm:$0xff] %v198
  // Predicated region
  $region14: #{image_subtraction_att.1} parent=0 // pred_check
    _
  $region15: #{image_subtraction_att.1} parent=0 // pred_check_branch
    %202 = sbr.rel (0) target = $region17
  $region16: #{image_subtraction_att.1} parent=0 // pred_region
    _
  $region17: #{image_subtraction_att.1} parent=0 // pred_fallthru
    _
  // Predicated region
  $region18: #{image_subtraction_att.1} parent=0 // pred_check
    _
  $region19: #{image_subtraction_att.1} parent=0 // pred_check_branch
    %204 = sbr.rel (0) target = $region21
  $region20: #{image_subtraction_att.1} parent=0 // pred_region
    _
  $region21: #{image_subtraction_att.1} parent=0 // pred_fallthru
    _

</llo_original>
